<compile_context>
chip_gen: v7x
topology: tpu7x:2x2x1
jax: 0.10.0
libtpu: 0.0.40
codegen_flags: <defaults>
</compile_context>

<pallas_src>
import functools

import jax
import jax.numpy as jnp
from jax import lax
from jax.experimental import pallas as pl
from jax.experimental.pallas import tpu as pltpu

_LANE = 128
_ROW_ALIGN = 32          # sublane granularity covering f32(8) / bf16(16) / int8(32)


def _cdiv(a, b):
    return -(-a // b)


def _round_up(x, m):
    return _cdiv(x, m) * m


def _chip_defaults():
    """(num_tensorcores, default max rows per tile), with safe fallbacks."""
    kind = ""
    try:
        kind = jax.devices()[0].device_kind.lower()
    except Exception:
        pass
    is_v7 = "v7" in kind
    num_tc = 2 if is_v7 else 1
    try:
        info = pltpu.get_tpu_info()
        for attr in ("num_cores", "num_tensorcores", "core_count"):
            v = getattr(info, attr, None)
            if v:
                num_tc = int(v)
                break
    except Exception:
        pass
    # v7x: big tiles amortize the ~0.35us/step overhead against ~3.2 TB/s HBM BW
    # and stay <10 MiB double-buffered (well under its 32 MiB scoped-VMEM default).
    # v5e/v6e: 1024-row tiles already reach ~85% of the HBM roofline.
    max_rows = 4096 if (is_v7 or num_tc >= 2) else 1024
    return max(1, num_tc), max_rows


def _choose_geometry(n_rows, num_tc, max_block_rows):
    """Returns (n_splits, n_steps, block_rows). Every block starts in-bounds."""
    if n_rows <= max_block_rows:
        return 1, 1, n_rows                              # one full-extent tile
    n_splits = 2 if num_tc >= 2 else 1
    block_rows = max_block_rows
    n_steps = _cdiv(n_rows, n_splits * block_rows)
    if n_splits > 1 and (n_splits * n_steps - 1) * block_rows >= n_rows:
        # Shrink the tile so the tail split's first block still starts in-bounds.
        block_rows = _round_up(_cdiv(n_rows, n_splits * n_steps), _ROW_ALIGN)
        if (n_splits * n_steps - 1) * block_rows >= n_rows:
            # Too small to split usefully: fall back to a single core.
            n_splits = 1
            block_rows = max_block_rows
            n_steps = _cdiv(n_rows, block_rows)
    return n_splits, n_steps, block_rows


def _loss_kernel(pd_ref, p_ref, out_ref, acc_ref, *,
                 margin, half_margin, inv_margin, robust_fine,
                 block_rows, n_steps, n_rows, needs_mask):
    i = pl.program_id(0)
    j = pl.program_id(1)

    @pl.when(j == 0)
    def _():
        acc_ref[...] = jnp.zeros_like(acc_ref)

    # Stream narrow dtypes from HBM, widen on the VPU (free vs. HBM bytes).
    pd = pd_ref[...].astype(jnp.float32)
    p = p_ref[...].astype(jnp.float32)

    dist_sq = pd * pd
    if robust_fine:
        # (1/margin) * clamp(sqrt(pd) * (0.5*margin - pd), min=0)^2   (sqrt -> EUP slot)
        hinge = jnp.maximum(jnp.sqrt(pd) * (half_margin - pd), 0.0)
        neg = inv_margin * (hinge * hinge)
    else:
        # clamp(margin - pd, min=0)^2
        hinge = jnp.maximum(margin - pd, 0.0)
        neg = hinge * hinge
    # p*dist_sq + (1-p)*neg  ==  neg + p*(dist_sq - neg)   (fewer VALU ops/elem)
    contrib = neg + p * (dist_sq - neg)

    if needs_mask:
        # Only the very last block of the grid can run past the data.
        is_tail = jnp.logical_and(i == pl.num_programs(0) - 1,
                                  j == pl.num_programs(1) - 1)

        @pl.when(is_tail)
        def _():
            row0 = (i * n_steps + j) * block_rows
            rows = row0 + lax.broadcasted_iota(jnp.int32, contrib.shape, 0)
            # Mask the *contribution* (garbage rows may hold NaN-producing data).
            acc_ref[...] += jnp.where(rows < n_rows, contrib, 0.0)

        @pl.when(jnp.logical_not(is_tail))
        def _():
            acc_ref[...] += contrib
    else:
        acc_ref[...] += contrib

    @pl.when(j == pl.num_programs(1) - 1)
    def _():
        # Lane-dense epilogue: sublane-only reduce -> (1,128) partial per split.
        out_ref[...] = jnp.sum(acc_ref[...], axis=0, keepdims=True).reshape(1, 1, _LANE)


def noise_robust_loss(pair_dist, P, margin, use_robust_loss, start_fine,
                      *, max_block_rows=None):
    """Pallas implementation of NoiseRobustLoss.forward.

    pair_dist: (N,) distances (float32/bfloat16 streamed as-is, else cast to f32).
    P:         (N,) {0,1} labels in any dtype (int8/bool is cheapest to stream).
    margin, use_robust_loss, start_fine: trace-time Python scalars (as in torch).
    For best performance call this under jax.jit (lets XLA fuse the tiny tail
    pad / reshape into the pallas operands via allow_input_fusion).
    """
    N = int(P.shape[0])
    # NOTE: N == 0 divides by zero, exactly like the PyTorch reference.

    pd_flat = pair_dist
    if pd_flat.dtype not in (jnp.float32, jnp.bfloat16):
        pd_flat = pd_flat.astype(jnp.float32)
    p_flat = P
    if p_flat.dtype == jnp.bool_:
        p_flat = p_flat.astype(jnp.int8)      # keep the 1-byte stream, cast in-kernel

    num_tc, default_rows = _chip_defaults()
    if max_block_rows is None:
        max_block_rows = default_rows
    max_block_rows = max(_ROW_ALIGN, _round_up(int(max_block_rows), _ROW_ALIGN))

    n_rows = _cdiv(N, _LANE)
    n_splits, n_steps, block_rows = _choose_geometry(n_rows, num_tc, max_block_rows)

    pad = n_rows * _LANE - N
    if pad:
        # <128 padded elements. Invariant: pd padded with 0.0 and P with 1 so the
        # padded lanes contribute exactly 0 loss in every branch (sqrt(0)=0 safe).
        pd_flat = jnp.pad(pd_flat, (0, pad))
        p_flat = jnp.pad(p_flat, (0, pad), constant_values=1)
    pd2 = pd_flat.reshape(n_rows, _LANE)      # free bitcast when pad == 0
    p2 = p_flat.reshape(n_rows, _LANE)

    needs_mask = (n_splits * n_steps * block_rows) > n_rows

    margin_f = float(margin)
    robust_fine = bool(use_robust_loss == 1) and bool(start_fine)
    kernel = functools.partial(
        _loss_kernel,
        margin=margin_f,
        half_margin=0.5 * margin_f,
        inv_margin=1.0 / margin_f,
        robust_fine=robust_fine,
        block_rows=block_rows,
        n_steps=n_steps,
        n_rows=n_rows,
        needs_mask=needs_mask,
    )

    # Split i owns the contiguous block range [i*n_steps, (i+1)*n_steps).
    tile_map = lambda i, j: (i * n_steps + j, 0)

    partials = pl.pallas_call(
        kernel,
        out_shape=jax.ShapeDtypeStruct((n_splits, 1, _LANE), jnp.float32),
        grid_spec=pltpu.PrefetchScalarGridSpec(
            num_scalar_prefetch=0,
            grid=(n_splits, n_steps),
            in_specs=[
                pl.BlockSpec((block_rows, _LANE), tile_map),
                pl.BlockSpec((block_rows, _LANE), tile_map),
            ],
            out_specs=pl.BlockSpec((1, 1, _LANE), lambda i, j: (i, 0, 0)),
            scratch_shapes=[pltpu.VMEM((block_rows, _LANE), jnp.float32)],
        ),
        compiler_params=pltpu.CompilerParams(
            dimension_semantics=("parallel", "arbitrary"),
            allow_input_fusion=[True, True],
        ),
    )(pd2, p2)

    return jnp.sum(partials) / (2.0 * N)


def _reference(pair_dist, P, margin, use_robust_loss, start_fine):
    pd = pair_dist.astype(jnp.float32)
    p = P.astype(jnp.float32)
    dist_sq = pd * pd
    if use_robust_loss == 1 and start_fine:
        loss = p * dist_sq + (1 - p) * (1.0 / margin) * jnp.square(
            jnp.maximum(jnp.sqrt(pd) * (0.5 * margin - pd), 0.0))
    else:
        loss = p * dist_sq + (1 - p) * jnp.square(jnp.maximum(margin - pd, 0.0))
    return jnp.sum(loss) / (2.0 * P.shape[0])


if __name__ == "__main__":
    key = jax.random.PRNGKey(0)
    margin = 1.5

    # (N, max_block_rows override, flag combos)
    cases = [
        (300, None, [(0, False), (1, False), (1, True)]),      # ragged N, single tile
        (37 * 128, 32, [(0, False), (1, False), (1, True)]),   # tiled + masked tail block
        (64 * 128, 32, [(1, True)]),                            # tiled, exact coverage
    ]

    failures = []
    for N, mbr, flag_list in cases:
        k1, k2 = jax.random.split(jax.random.fold_in(key, N))
        pair_dist = jnp.abs(jax.random.normal(k1, (N,), dtype=jnp.float32))
        P = (jax.random.uniform(k2, (N,)) > 0.5).astype(jnp.int8)   # narrow label stream

        for use_robust_loss, start_fine in flag_list:
            fn = jax.jit(functools.partial(
                noise_robust_loss, margin=margin,
                use_robust_loss=use_robust_loss, start_fine=start_fine,
                max_block_rows=mbr))
            out = jax.block_until_ready(fn(pair_dist, P))
            ref = _reference(pair_dist, P, margin, use_robust_loss, start_fine)
            if not jnp.allclose(out, ref, rtol=1e-5, atol=1e-5):
                failures.append((N, use_robust_loss, start_fine, float(out), float(ref)))

    if failures:
        raise SystemExit(f"MISMATCH: {failures}")
    print("KERNEL_OK")
</pallas_src>

<mosaic_0001>
module attributes {stable_mosaic.version = 11 : i64} {
  func.func @_loss_kernel(%arg0: i32, %arg1: i32, %arg2: memref<3x128xf32, #tpu.memory_space<vmem>>, %arg3: memref<3x128xi8, #tpu.memory_space<vmem>>, %arg4: memref<1x1x128xf32, #tpu.memory_space<vmem>>, %arg5: memref<3x128xf32, #tpu.memory_space<vmem>>) attributes {dimension_semantics = [#tpu.dimension_semantics<parallel>, #tpu.dimension_semantics<arbitrary>], iteration_bounds = array<i64: 1, 1>, scalar_prefetch = 0 : i64, scratch_operands = 1 : i64, tpu.core_type = #tpu.core_type<tc>, window_params = [{transform_indices = @transform_0, window_bounds = array<i64: 3, 128>}, {transform_indices = @transform_1, window_bounds = array<i64: 3, 128>}, {transform_indices = @transform_2, window_bounds = array<i64: 1, 1, 128>}]} {
    %c0_i32 = arith.constant 0 : i32
    %0 = arith.cmpi eq, %arg1, %c0_i32 : i32
    %1 = arith.extui %0 : i1 to i32
    %c0_i32_0 = arith.constant 0 : i32
    %2 = arith.cmpi ne, %1, %c0_i32_0 : i32
    scf.if %2 {
      %cst_11 = arith.constant 0.000000e+00 : f32
      %21 = vector.broadcast %cst_11 : f32 to vector<3x128xf32>
      %c0_12 = arith.constant 0 : index
      %c0_13 = arith.constant 0 : index
      %22 = vector.load %arg5[%c0_12, %c0_13] : memref<3x128xf32, #tpu.memory_space<vmem>>, vector<3x128xf32>
      tpu.vector_store %arg5[%c0_12, %c0_13], %21 {strides = array<i32>} : memref<3x128xf32, #tpu.memory_space<vmem>>, vector<3x128xf32>,
    } else {
    }
    %c0 = arith.constant 0 : index
    %c0_1 = arith.constant 0 : index
    %3 = vector.load %arg2[%c0, %c0_1] : memref<3x128xf32, #tpu.memory_space<vmem>>, vector<3x128xf32>
    %c0_2 = arith.constant 0 : index
    %c0_3 = arith.constant 0 : index
    %4 = vector.load %arg3[%c0_2, %c0_3] : memref<3x128xi8, #tpu.memory_space<vmem>>, vector<3x128xi8>
    %5 = arith.sitofp %4 : vector<3x128xi8> to vector<3x128xf32>
    %6 = arith.mulf %3, %3 : vector<3x128xf32>
    %cst = arith.constant 1.500000e+00 : f32
    %7 = vector.broadcast %cst : f32 to vector<3x128xf32>
    %8 = arith.subf %7, %3 : vector<3x128xf32>
    %cst_4 = arith.constant 0.000000e+00 : f32
    %9 = vector.broadcast %cst_4 : f32 to vector<3x128xf32>
    %10 = arith.maximumf %8, %9 : vector<3x128xf32>
    %11 = arith.mulf %10, %10 : vector<3x128xf32>
    %12 = arith.subf %6, %11 : vector<3x128xf32>
    %13 = arith.mulf %5, %12 : vector<3x128xf32>
    %14 = arith.addf %11, %13 : vector<3x128xf32>
    %c0_5 = arith.constant 0 : index
    %c0_6 = arith.constant 0 : index
    %15 = vector.load %arg5[%c0_5, %c0_6] : memref<3x128xf32, #tpu.memory_space<vmem>>, vector<3x128xf32>
    %16 = arith.addf %15, %14 : vector<3x128xf32>
    %c0_7 = arith.constant 0 : index
    %c0_8 = arith.constant 0 : index
    %17 = vector.load %arg5[%c0_7, %c0_8] : memref<3x128xf32, #tpu.memory_space<vmem>>, vector<3x128xf32>
    tpu.vector_store %arg5[%c0_7, %c0_8], %16 {strides = array<i32>} : memref<3x128xf32, #tpu.memory_space<vmem>>, vector<3x128xf32>,
    %c0_i32_9 = arith.constant 0 : i32
    %18 = arith.cmpi eq, %arg1, %c0_i32_9 : i32
    %19 = arith.extui %18 : i1 to i32
    %c0_i32_10 = arith.constant 0 : i32
    %20 = arith.cmpi ne, %19, %c0_i32_10 : i32
    scf.if %20 {
      %c0_11 = arith.constant 0 : index
      %c0_12 = arith.constant 0 : index
      %21 = vector.load %arg5[%c0_11, %c0_12] : memref<3x128xf32, #tpu.memory_space<vmem>>, vector<3x128xf32>
      %cst_13 = arith.constant dense<0.000000e+00> : vector<128xf32>
      %22 = vector.multi_reduction <add>, %21, %cst_13 [0] : vector<3x128xf32> to vector<128xf32>
      %23 = vector.shape_cast %22 : vector<128xf32> to vector<1x128xf32>
      %24 = vector.shape_cast %23 : vector<1x128xf32> to vector<1x1x128xf32>
      %c0_14 = arith.constant 0 : index
      %c0_15 = arith.constant 0 : index
      %c0_16 = arith.constant 0 : index
      %25 = vector.load %arg4[%c0_14, %c0_15, %c0_16] : memref<1x1x128xf32, #tpu.memory_space<vmem>>, vector<1x1x128xf32>
      tpu.vector_store %arg4[%c0_14, %c0_15, %c0_16], %24 {strides = array<i32>} : memref<1x1x128xf32, #tpu.memory_space<vmem>>, vector<1x1x128xf32>,
    } else {
    }
    return
  }
  func.func @transform_0(%arg0: i32, %arg1: i32) -> (i32, i32) {
    %c1_i32 = arith.constant 1 : i32
    %0 = arith.muli %arg0, %c1_i32 : i32
    %1 = arith.addi %0, %arg1 : i32
    %c0_i32 = arith.constant 0 : i32
    %c0_i32_0 = arith.constant 0 : i32
    return %1, %c0_i32 : i32, i32
  }
  func.func @transform_1(%arg0: i32, %arg1: i32) -> (i32, i32) {
    %c1_i32 = arith.constant 1 : i32
    %0 = arith.muli %arg0, %c1_i32 : i32
    %1 = arith.addi %0, %arg1 : i32
    %c0_i32 = arith.constant 0 : i32
    %c0_i32_0 = arith.constant 0 : i32
    return %1, %c0_i32 : i32, i32
  }
  func.func @transform_2(%arg0: i32, %arg1: i32) -> (i32, i32, i32) {
    %c0_i32 = arith.constant 0 : i32
    %c0_i32_0 = arith.constant 0 : i32
    %c0_i32_1 = arith.constant 0 : i32
    return %arg0, %c0_i32, %c0_i32_0 : i32, i32, i32
  }
}

</mosaic_0001>

<llo_original>
// kernel: noise_robust_loss.2
$region0: #{noise_robust_loss.2}
  #allocation0 [shape = 'u32[]', space=smem, size = 0x4, offset = 0x4, fixed_abs, tag = 'smem constant byte address 0x4 - core index']
  #allocation1 [shape = 'u32[144,128]{1,0:T(1,128)}', space=vmem, size = 0x12000, scoped, tag = 'internal scratch']
  #allocation2 [shape = 'f32[3,128]{1,0:T(4,128)}', space=vmem, size = 0x800, scoped, tag = 'scratch operand']
  #allocation3 [shape = 'u32[2048]{0}', space=vmem, size = 0x2000, scoped, tag = 'scoped memory for noise_robust_loss.2']
  #allocation4 [shape = 'u32[2048]{0}', space=vmem, size = 0x2000, scoped, tag = 'scoped memory for noise_robust_loss.2']
  #allocation5 [shape = 'u32[2048]{0}', space=vmem, size = 0x2000, scoped, tag = 'scoped memory for noise_robust_loss.2']
  #allocation6 [shape = 'u32[2048]{0}', space=vmem, size = 0x2000, scoped, tag = 'scoped memory for noise_robust_loss.2']
  #allocation7 [shape = 'u32[2048]{0}', space=vmem, size = 0x2000, scoped, tag = 'scoped memory for noise_robust_loss.2']
  #allocation8 [shape = 'u32[2048]{0}', space=vmem, size = 0x2000, scoped, tag = 'scoped memory for noise_robust_loss.2']
  #allocation9 [shape = 'u32[2048]{0}', space=vmem, size = 0x2000, scoped, tag = 'scoped memory for noise_robust_loss.2']
  #allocation10 [shape = 'u32[2048]{0}', space=vmem, size = 0x2000, scoped, tag = 'scoped memory for noise_robust_loss.2']
  #allocation11 [shape = 'u32[2048]{0}', space=vmem, size = 0x2000, scoped, tag = 'scoped memory for noise_robust_loss.2']
  #allocation12 [shape = 'u32[2048]{0}', space=vmem, size = 0x2000, scoped, tag = 'scoped memory for noise_robust_loss.2']
  %s0 = inlined_call_operand.hbm [shape: f32[300], index: 0, kind: input, shape index: {}]
  %s1 = inlined_call_operand.<no memory space> [shape: f32[], index: 1, kind: input, shape index: {}]
  %s2 = inlined_call_operand.vmem [shape: s8[300], index: 2, kind: input, shape index: {}]
  %s3 = inlined_call_operand.<no memory space> [shape: s8[], index: 3, kind: input, shape index: {}]
  %s4 = inlined_call_operand.vmem [shape: f32[1,1,128], index: 4, kind: output, shape index: {}]
  %s5 = sld [smem:[#allocation0]]
  $region30: #{noise_robust_loss.2} parent=0
    _
  %s7 = ssub.s32 1, %s5
  %s8 = scalar_select 0, %s7, %s5
  %v9 = vstv %s1
  %v10 = vstv %s3
  %v12 = vshll.u32 %v10, 24
  %v13 = vshra.s32 %v12, 24
  $region1: #{noise_robust_loss.2} parent=0
    #allocation13 [shape = 'u8[2048]{0}', space=vmem, size = 0x800, scoped, tag = 'operand span for operand 0']
    #allocation14 [shape = 's32[1]{0}', space=sflag, size = 0x4, scoped, tag = 'scoped memory for noise_robust_loss.2']
    #allocation15 [shape = 'u8[2048]{0}', space=vmem, size = 0x800, dematerialized = true, scoped, tag = 'FusionAdapter Buffer %fusion.1 = f32[3,128]{1,0:T(4,128)} fusion(%param_0.6, %param_1.6), kind=kLoop, calls=%fused_computation.1.clone, metadata={op_name="jit(noise_robust_loss)/reshape" stack_frame_id=10}']
    #allocation16 [shape = 'u8[512]{0}', space=vmem, size = 0x400, dematerialized = true, scoped, tag = 'FusionAdapter Buffer %fusion.3 = s8[3,128]{1,0:T(4,128)(4,1)} fusion(%param_2.2, %param_3), kind=kLoop, calls=%fused_computation.3.clone, metadata={op_name="jit(noise_robust_loss)/reshape" stack_frame_id=11}']
    %14 = vsyncpa [#allocation14], 0
    // Predicated region
    $region2: #{noise_robust_loss.2} parent=1 // pred_check
      _
    $region3: #{noise_robust_loss.2} parent=1 // pred_check_branch
      %16 = sbr.rel (0) target = $region5
    $region4: #{noise_robust_loss.2} parent=1 // pred_region
      %s17 = sadd.s32 0, 0
      %s18 = ssub.s32 1, %s17
      %s19 = smul.u32 64, %s18
      %s21 = ssub.s32 64, %s19
      %22 = vsyncadd [#allocation14], %s21
      %p23 = scmp.ne.s32.totalorder 0, %s19
      %s24 = smul.addr %s17, 64
      %s25 = scalar_lea.hbm %s0, %s24
      %s26 = smul.u32 %s18, 4
      %s27 = sshll.u32 %s26, 4
      %s28 = sshll.u32 [#allocation13], 4
      %s29 = int_to_ptr.vmem [resolvable:$true] %s28
      %31 = dma.hbm_to_vmem [thread:$0]  (%p23), %s25, %s27, %s29, [#allocation14]
    $region5: #{noise_robust_loss.2} parent=1 // pred_fallthru
      _
    // Predicated region
    $region6: #{noise_robust_loss.2} parent=1 // pred_check
      _
    $region7: #{noise_robust_loss.2} parent=1 // pred_check_branch
      %33 = sbr.rel (0) target = $region9
    $region8: #{noise_robust_loss.2} parent=1 // pred_region
      %s34 = sadd.s32 0, 0
      %s35 = ssub.s32 1, %s34
      %s36 = smul.u32 16, %s35
      %p37 = scmp.lt.s32.totalorder %s34, 0
      %s38 = scalar_select %p37, %s34, 0
      %s39 = scalar_lea.vmem %s2, %s38
      %s40 = sadd.s32 0, 0
      %s41 = ssub.s32 1, %s40
      %s42 = smul.u32 16, %s41
    $region9: #{noise_robust_loss.2} parent=1 // pred_fallthru
      _
    // Predicated region
    $region10: #{noise_robust_loss.2} parent=1 // pred_check
      _
    $region11: #{noise_robust_loss.2} parent=1 // pred_check_branch
      %44 = sbr.rel (0) target = $region13
    $region12: #{noise_robust_loss.2} parent=1 // pred_region
      %45 = dma.done [#allocation14], 64
    $region13: #{noise_robust_loss.2} parent=1 // pred_fallthru
      _
    %s46 = sadd.s32 0, 0
    %s47 = ssub.s32 1, %s46
    %s48 = smul.u32 16, %s47
    %p49 = scmp.lt.s32.totalorder %s46, 0
    %s50 = scalar_select %p49, %s46, 0
    %s51 = scalar_lea.vmem %s2, %s50
    %s52 = sadd.s32 0, 0
    %s53 = ssub.s32 1, %s52
    %s54 = smul.u32 64, %s53
    %s55 = sadd.s32 0, 0
    %s56 = ssub.s32 1, %s55
    %s57 = smul.u32 16, %s56
    %p58 = scmp.lt.s32.totalorder %s55, 0
    %s59 = scalar_select %p58, %s55, 0
    %s60 = scalar_lea.vmem %s2, %s59
    %s61 = sadd.s32 0, 0
    %s62 = ssub.s32 1, %s61
    %s63 = smul.u32 16, %s62
    %v64 = vld [vmem:[#allocation13] sm:$0x7]
    %s65 = ssub.s32 0, %s52
    %v66 = vstv %s65
    %vm67 = vcmp.lt.s32.totalorder %v66, 0
    %v68 = vsel %vm67, %v9, %v64
    %s69 = smul.addr %s52, 1024
    %v70 = vlaneseq
    %v71 = vstv %s69
    %v72 = vadd.s32 %v70, %v71
    %vm73 = vcmp.lt.s32.totalorder %v72, 300
    %v74 = vsel %vm73, %v68, %v9
    %76 = vst [vmem:[#allocation15] sm:$0xf] %v74
    %s77 = ssub.s32 0, %s61
    %p78 = scmp.lt.s32.totalorder %s77, 0
    %s79 = scalar_select %p78, 0, 255
    %s80 = sand.u32 15, %s79
    %s81 = sand.u32 %s80, 15
    %p82 = scmp.ne.s32.totalorder %s81, 0
    %s83 = scalar_select %p82, 1, 0
    %v84 = vld [vmem:[%s60] ss:$0 sm:%s83]
    %v85 = vunpack.c.0.s8 %v84
    %v86 = vunpack.c.1.s8 %v84
    %v87 = vunpack.c.2.s8 %v84
    %v88 = vunpack.c.3.s8 %v84
    %s89 = ssub.s32 0, %s61
    %v90 = vstv %s89
    %vm91 = vcmp.lt.s32.totalorder %v90, 0
    %v92 = vsel %vm91, %v13, %v85
    %s93 = smul.addr %s61, 1024
    %v94 = vlaneseq
    %v95 = vstv %s93
    %v96 = vadd.s32 %v94, %v95
    %vm97 = vcmp.lt.s32.totalorder %v96, 300
    %v98 = vsel %vm97, %v92, %v13
    %v100 = vpack.c.b16 0, %v98
    %v101 = vpack.c.b8 0, %v100
    %102 = vst [vmem:[#allocation16] sm:$0x1] %v101
    %p103 = scmp.eq.s32.totalorder 0, 0
    // Predicated region
    $region14: #{noise_robust_loss.2} parent=1 // pred_check
      %p104 = pneg %p103
    $region15: #{noise_robust_loss.2} parent=1 // pred_check_branch
      %106 = sbr.rel (%p104) target = $region17
    $region16: #{noise_robust_loss.2} parent=1 // pred_region
      %107 = vst [vmem:[#allocation2] sm:$0x7] 0.0
    $region17: #{noise_robust_loss.2} parent=1 // pred_fallthru
      _
    %v108 = vld [vmem:[#allocation15] sm:$0x7]
    %v109 = vld [vmem:[#allocation16] sm:$0x1]
    %v110 = vunpack.c.0.s8 %v109
    %v111 = vcvt.s32.f32 %v110
    %v112 = vmul.f32 %v108, %v108
    %v113 = vsub.f32 1.5, %v108
    %v114 = vmax.f32 %v113, 0.0
    %v115 = vmul.f32 %v114, %v114
    %v116 = vsub.f32 %v112, %v115
    %v117 = vmul.f32 %v111, %v116
    %v118 = vadd.f32 %v115, %v117
    %v119 = vld [vmem:[#allocation2] sm:$0x7]
    %v120 = vadd.f32 %v119, %v118
    %121 = vst [vmem:[#allocation2] sm:$0x7] %v120
    // Predicated region
    $region18: #{noise_robust_loss.2} parent=1 // pred_check
      %p122 = pneg %p103
    $region19: #{noise_robust_loss.2} parent=1 // pred_check_branch
      %124 = sbr.rel (%p122) target = $region21
    $region20: #{noise_robust_loss.2} parent=1 // pred_region
      %v125 = vld [vmem:[#allocation2] sm:$0x7]
      %vm126 = vcmask 1042432
      %v127 = vsel %vm126, %v125, 0.0
      %v128 = vrot.slane %v127, 4
      %v129 = vadd.f32 %v127, %v128
      %v130 = vrot.slane %v129, 2
      %v131 = vadd.f32 %v129, %v130
      %v132 = vrot.slane %v131, 1
      %v133 = vadd.f32 %v131, %v132
      %134 = vst [vmem:[%s4] sm:$0x1] %v133
    $region21: #{noise_robust_loss.2} parent=1 // pred_fallthru
      _
    // Predicated region
    $region22: #{noise_robust_loss.2} parent=1 // pred_check
      _
    $region23: #{noise_robust_loss.2} parent=1 // pred_check_branch
      %136 = sbr.rel (0) target = $region25
    $region24: #{noise_robust_loss.2} parent=1 // pred_region
      _
    $region25: #{noise_robust_loss.2} parent=1 // pred_fallthru
      _
    // Predicated region
    $region26: #{noise_robust_loss.2} parent=1 // pred_check
      _
    $region27: #{noise_robust_loss.2} parent=1 // pred_check_branch
      %138 = sbr.rel (0) target = $region29
    $region28: #{noise_robust_loss.2} parent=1 // pred_region
      _
    $region29: #{noise_robust_loss.2} parent=1 // pred_fallthru
      _
    %139 = vsyncpa [#allocation14], 1

</llo_original>
